<compile_context>
chip_gen: v6e
topology: v6e:2x2x1
jax: 0.10.0
libtpu: 0.0.40
codegen_flags: <defaults>
</compile_context>

<pallas_src>
import jax
import jax.numpy as jnp
from jax.experimental import pallas as pl
from jax.experimental.pallas import tpu as pltpu


def _dense_kernel(x_ref, w_ref, b_ref, o_ref):
    """o = x @ W^T + b, single-shot MXU matmul with f32 accumulation."""
    acc = jnp.dot(x_ref[...], w_ref[...], preferred_element_type=jnp.float32)
    o_ref[...] = (acc + b_ref[...]).astype(o_ref.dtype)


def _round_up(v, m):
    return ((v + m - 1) // m) * m


def encoder_out_layer_forward(x, w_t, b, *, compute_dtype=jnp.bfloat16,
                              tm_large=256):
    """Forward pass of Encoder_out_layer.

    Args:
      x:   (B, C, H, W) or (B, 2048) input (flattened features must be 2048).
      w_t: (2048, dim_z) == W^T of the nn.Linear(2048, dim_z).
      b:   (dim_z,) bias.
    Returns:
      (B, dim_z) array in x's dtype.
    """
    xf = x.reshape(x.shape[0], -1)            # torch.flatten(x, 1)
    B, K = xf.shape
    Kw, N = w_t.shape
    assert K == Kw == 2048, f"flattened feature dim must be 2048, got {K}"

    out_dtype = xf.dtype

    # Pad dim_z to a multiple of 128 -> lane-dense output stores.
    Np = _round_up(N, 128)
    if Np != N:
        w_t = jnp.pad(w_t, ((0, 0), (0, Np - N)))
        b = jnp.pad(b, (0, Np - N))

    # bf16 inputs, f32 accumulate / bias.
    xf_c = xf.astype(compute_dtype)
    w_c = w_t.astype(compute_dtype)
    b2 = b.reshape(1, Np).astype(jnp.float32)

    # Batch tiling: single step for small B (sublane-padded), tm_large tiles
    # with a "parallel" grid axis for large B.
    if B <= 512:
        Bp = _round_up(B, 8)
        tm = Bp
    else:
        tm = tm_large
        Bp = _round_up(B, tm)
    if Bp != B:
        xf_c = jnp.pad(xf_c, ((0, Bp - B), (0, 0)))
    grid_m = Bp // tm

    itemsize_c = jnp.dtype(compute_dtype).itemsize
    cost = pl.CostEstimate(
        flops=2 * Bp * K * Np,
        transcendentals=0,
        bytes_accessed=(Bp * K + K * Np + Np) * itemsize_c
        + Bp * Np * jnp.dtype(out_dtype).itemsize,
    )

    out = pl.pallas_call(
        _dense_kernel,
        out_shape=jax.ShapeDtypeStruct((Bp, Np), out_dtype),
        grid_spec=pltpu.PrefetchScalarGridSpec(
            num_scalar_prefetch=0,
            grid=(grid_m,),
            in_specs=[
                pl.BlockSpec((tm, K), lambda i: (i, 0)),   # x rows for this tile
                pl.BlockSpec((K, Np), lambda i: (0, 0)),   # W^T resident
                pl.BlockSpec((1, Np), lambda i: (0, 0)),   # bias resident
            ],
            out_specs=pl.BlockSpec((tm, Np), lambda i: (i, 0)),
        ),
        compiler_params=pltpu.CompilerParams(
            dimension_semantics=("parallel",),
        ),
        cost_estimate=cost,
    )(xf_c, w_c, b2)

    return out[:B, :N]


def init_params(key, dim_z, in_features=2048):
    """Deterministic params mimicking init.orthogonal_ on the Linear weight."""
    kw, kb = jax.random.split(key)
    g = jax.random.normal(kw, (in_features, dim_z), dtype=jnp.float32)
    q, _ = jnp.linalg.qr(g)                   # orthonormal columns
    w_t = q                                   # stored already as W^T (2048, dim_z)
    bound = 1.0 / jnp.sqrt(in_features)
    b = jax.random.uniform(kb, (dim_z,), minval=-bound, maxval=bound,
                           dtype=jnp.float32)
    return w_t, b


if __name__ == "__main__":
    key = jax.random.PRNGKey(0)
    k_x, k_p = jax.random.split(key)

    # Small shapes consistent with the module: flatten must yield 2048 features.
    B, C, H, W = 2, 8, 16, 16                 # 8*16*16 = 2048
    dim_z = 128

    x = jax.random.normal(k_x, (B, C, H, W), dtype=jnp.float32)
    w_t, b = init_params(k_p, dim_z)

    out = encoder_out_layer_forward(x, w_t, b)
    jax.block_until_ready(out)
    assert out.shape == (B, dim_z)
    assert out.dtype == x.dtype

    # Reference with the same bf16-input / f32-accumulate math.
    xf = x.reshape(B, -1)
    ref_bf16 = jnp.dot(xf.astype(jnp.bfloat16), w_t.astype(jnp.bfloat16),
                       preferred_element_type=jnp.float32) + b
    assert jnp.allclose(out, ref_bf16, atol=1e-4, rtol=1e-4)

    # Sanity check against the full-precision reference (bf16 input rounding).
    ref_f32 = xf @ w_t + b
    assert jnp.allclose(out, ref_f32, atol=5e-2, rtol=5e-2)

    print("KERNEL_OK")
</pallas_src>

<mosaic_0001>
module attributes {stable_mosaic.version = 11 : i64} {
  func.func @_dense_kernel(%arg0: i32, %arg1: memref<8x2048xbf16, #tpu.memory_space<vmem>>, %arg2: memref<2048x128xbf16, #tpu.memory_space<vmem>>, %arg3: memref<1x128xf32, #tpu.memory_space<vmem>>, %arg4: memref<8x128xf32, #tpu.memory_space<vmem>>) attributes {dimension_semantics = [#tpu.dimension_semantics<parallel>], iteration_bounds = array<i64: 1>, scalar_prefetch = 0 : i64, scratch_operands = 0 : i64, tpu.core_type = #tpu.core_type<tc>, window_params = [{transform_indices = @transform_0, window_bounds = array<i64: 8, 2048>}, {pipeline_mode = #tpu.pipeline_mode<synchronous>, transform_indices = @transform_1, window_bounds = array<i64: 2048, 128>}, {pipeline_mode = #tpu.pipeline_mode<synchronous>, transform_indices = @transform_2, window_bounds = array<i64: 1, 128>}, {transform_indices = @transform_3, window_bounds = array<i64: 8, 128>}]} {
    %c0 = arith.constant 0 : index
    %c0_0 = arith.constant 0 : index
    %0 = vector.load %arg1[%c0, %c0_0] : memref<8x2048xbf16, #tpu.memory_space<vmem>>, vector<8x2048xbf16>
    %c0_1 = arith.constant 0 : index
    %c0_2 = arith.constant 0 : index
    %1 = vector.load %arg2[%c0_1, %c0_2] : memref<2048x128xbf16, #tpu.memory_space<vmem>>, vector<2048x128xbf16>
    %cst = arith.constant dense<0.000000e+00> : vector<8x128xf32>
    %2 = tpu.matmul %0, %1, %cst {dimension_numbers = #tpu.dot_dimension_numbers<[1], [0], [0], [1], [0, 0, 1, 1], [], []>} : vector<8x2048xbf16>, vector<2048x128xbf16>, vector<8x128xf32> -> vector<8x128xf32>
    %c0_3 = arith.constant 0 : index
    %c0_4 = arith.constant 0 : index
    %3 = vector.load %arg3[%c0_3, %c0_4] : memref<1x128xf32, #tpu.memory_space<vmem>>, vector<1x128xf32>
    %4 = vector.broadcast %3 : vector<1x128xf32> to vector<8x128xf32>
    %5 = arith.addf %2, %4 : vector<8x128xf32>
    %c0_5 = arith.constant 0 : index
    %c0_6 = arith.constant 0 : index
    %6 = vector.load %arg4[%c0_5, %c0_6] : memref<8x128xf32, #tpu.memory_space<vmem>>, vector<8x128xf32>
    tpu.vector_store %arg4[%c0_5, %c0_6], %5 {strides = array<i32>} : memref<8x128xf32, #tpu.memory_space<vmem>>, vector<8x128xf32>,
    return
  }
  func.func @transform_0(%arg0: i32) -> (i32, i32) {
    %c0_i32 = arith.constant 0 : i32
    %c0_i32_0 = arith.constant 0 : i32
    return %arg0, %c0_i32 : i32, i32
  }
  func.func @transform_1(%arg0: i32) -> (i32, i32) {
    %c0_i32 = arith.constant 0 : i32
    %c0_i32_0 = arith.constant 0 : i32
    %c0_i32_1 = arith.constant 0 : i32
    return %c0_i32, %c0_i32_0 : i32, i32
  }
  func.func @transform_2(%arg0: i32) -> (i32, i32) {
    %c0_i32 = arith.constant 0 : i32
    %c0_i32_0 = arith.constant 0 : i32
    %c0_i32_1 = arith.constant 0 : i32
    return %c0_i32, %c0_i32_0 : i32, i32
  }
  func.func @transform_3(%arg0: i32) -> (i32, i32) {
    %c0_i32 = arith.constant 0 : i32
    %c0_i32_0 = arith.constant 0 : i32
    return %arg0, %c0_i32 : i32, i32
  }
}

</mosaic_0001>

<llo_original>
// kernel: tpu_custom_call.1
$region0: #{tpu_custom_call.1}
  #allocation0 [shape = 'u32[]', space=smem, size = 0x4, offset = 0x4, fixed_abs, tag = 'smem constant byte address 0x4 - core index']
  #allocation1 [shape = 'u32[144,128]{1,0:T(1,128)}', space=vmem, size = 0x12000, scoped, tag = 'internal scratch']
  %s0 = inlined_call_operand.hbm [shape: bf16[8,2048], index: 0, kind: input, shape index: {}]
  %s1 = inlined_call_operand.hbm [shape: bf16[2048,128], index: 1, kind: input, shape index: {}]
  %s2 = inlined_call_operand.vmem [shape: f32[1,128], index: 2, kind: input, shape index: {}]
  %s3 = inlined_call_operand.hbm [shape: f32[8,128], index: 3, kind: output, shape index: {}]
  %s4 = sld [smem:[#allocation0]]
  $region30: #{tpu_custom_call.1} parent=0
    _
  %s6 = ssub.s32 1, %s4
  %s7 = scalar_select 0, %s6, %s4
  $region1: #{tpu_custom_call.1} parent=0
    #allocation2 [shape = 'u8[32768]{0}', space=vmem, size = 0x8000, scoped, tag = 'input window, operand 0, single buffered']
    #allocation3 [shape = 's32[1]{0}', space=sflag, size = 0x4, scoped, tag = 'scoped memory for tpu_custom_call.1']
    #allocation4 [shape = 's32[1]{0}', space=sflag, size = 0x4, scoped, tag = 'scoped memory for tpu_custom_call.1']
    #allocation5 [shape = 'u8[524288]{0}', space=vmem, size = 0x80000, scoped, tag = 'input window, operand 1, single buffered']
    #allocation6 [shape = 's32[1]{0}', space=sflag, size = 0x4, scoped, tag = 'scoped memory for tpu_custom_call.1']
    #allocation7 [shape = 'u8[4096]{0}', space=vmem, size = 0x1000, scoped, tag = 'output window, operand 0, single buffered']
    %8 = vsyncpa [#allocation3], 0
    %9 = vsyncpa [#allocation6], 0
    %10 = vsyncpa [#allocation4], 0
    // Predicated region
    $region2: #{tpu_custom_call.1} parent=1 // pred_check
      _
    $region3: #{tpu_custom_call.1} parent=1 // pred_check_branch
      %12 = sbr.rel (0) target = $region5
    $region4: #{tpu_custom_call.1} parent=1 // pred_region
      %s14 = ssub.s32 1024, 1024
      %15 = vsyncadd [#allocation3], %s14
      %s17 = sshll.u32 [#allocation2], 4
      %s18 = int_to_ptr.vmem [resolvable:$true] %s17
      %20 = dma.hbm_to_vmem [thread:$0]  %s0, 1024, %s18, [#allocation3]
    $region5: #{tpu_custom_call.1} parent=1 // pred_fallthru
      _
    // Predicated region
    $region6: #{tpu_custom_call.1} parent=1 // pred_check
      _
    $region7: #{tpu_custom_call.1} parent=1 // pred_check_branch
      %22 = sbr.rel (0) target = $region9
    $region8: #{tpu_custom_call.1} parent=1 // pred_region
      %s24 = ssub.s32 16384, 16384
      %25 = vsyncadd [#allocation6], %s24
      %s26 = sshll.u32 [#allocation5], 4
      %s27 = int_to_ptr.vmem [resolvable:$true] %s26
      %32 = dma.hbm_to_vmem [thread:$0]  %s1, 16384, %s27, [#allocation6], 64, 64, 4
    $region9: #{tpu_custom_call.1} parent=1 // pred_fallthru
      _
    // Predicated region
    $region10: #{tpu_custom_call.1} parent=1 // pred_check
      _
    $region11: #{tpu_custom_call.1} parent=1 // pred_check_branch
      %34 = sbr.rel (0) target = $region13
    $region12: #{tpu_custom_call.1} parent=1 // pred_region
      _
    $region13: #{tpu_custom_call.1} parent=1 // pred_fallthru
      _
    // Predicated region
    $region14: #{tpu_custom_call.1} parent=1 // pred_check
      _
    $region15: #{tpu_custom_call.1} parent=1 // pred_check_branch
      %36 = sbr.rel (0) target = $region17
    $region16: #{tpu_custom_call.1} parent=1 // pred_region
      %37 = dma.done [#allocation3], 1024
    $region17: #{tpu_custom_call.1} parent=1 // pred_fallthru
      _
    // Predicated region
    $region18: #{tpu_custom_call.1} parent=1 // pred_check
      _
    $region19: #{tpu_custom_call.1} parent=1 // pred_check_branch
      %39 = sbr.rel (0) target = $region21
    $region20: #{tpu_custom_call.1} parent=1 // pred_region
      %40 = dma.done [#allocation6], 16384
    $region21: #{tpu_custom_call.1} parent=1 // pred_fallthru
      _
    %v42 = vld [vmem:[#allocation2] sm:$0xff]
    %v43 = vld [vmem:[#allocation2 + $0x8] sm:$0xff]
    %v44 = vld [vmem:[#allocation2 + $0x10] sm:$0xff]
    %v45 = vld [vmem:[#allocation2 + $0x18] sm:$0xff]
    %v46 = vld [vmem:[#allocation2 + $0x20] sm:$0xff]
    %v47 = vld [vmem:[#allocation2 + $0x28] sm:$0xff]
    %v48 = vld [vmem:[#allocation2 + $0x30] sm:$0xff]
    %v49 = vld [vmem:[#allocation2 + $0x38] sm:$0xff]
    %v50 = vld [vmem:[#allocation5] sm:$0xf]
    %v51 = vld [vmem:[#allocation5 + $0x4] sm:$0xf]
    %v52 = vld [vmem:[#allocation5 + $0x8] sm:$0xf]
    %v53 = vld [vmem:[#allocation5 + $0xc] sm:$0xf]
    %v54 = vld [vmem:[#allocation5 + $0x10] sm:$0xf]
    %v55 = vld [vmem:[#allocation5 + $0x14] sm:$0xf]
    %v56 = vld [vmem:[#allocation5 + $0x18] sm:$0xf]
    %v57 = vld [vmem:[#allocation5 + $0x1c] sm:$0xf]
    %v58 = vld [vmem:[#allocation5 + $0x20] sm:$0xf]
    %v59 = vld [vmem:[#allocation5 + $0x24] sm:$0xf]
    %v60 = vld [vmem:[#allocation5 + $0x28] sm:$0xf]
    %v61 = vld [vmem:[#allocation5 + $0x2c] sm:$0xf]
    %v62 = vld [vmem:[#allocation5 + $0x30] sm:$0xf]
    %v63 = vld [vmem:[#allocation5 + $0x34] sm:$0xf]
    %v64 = vld [vmem:[#allocation5 + $0x38] sm:$0xf]
    %v65 = vld [vmem:[#allocation5 + $0x3c] sm:$0xf]
    %v66 = vld [vmem:[#allocation5 + $0x40] sm:$0xf]
    %v67 = vld [vmem:[#allocation5 + $0x44] sm:$0xf]
    %v68 = vld [vmem:[#allocation5 + $0x48] sm:$0xf]
    %v69 = vld [vmem:[#allocation5 + $0x4c] sm:$0xf]
    %v70 = vld [vmem:[#allocation5 + $0x50] sm:$0xf]
    %v71 = vld [vmem:[#allocation5 + $0x54] sm:$0xf]
    %v72 = vld [vmem:[#allocation5 + $0x58] sm:$0xf]
    %v73 = vld [vmem:[#allocation5 + $0x5c] sm:$0xf]
    %v74 = vld [vmem:[#allocation5 + $0x60] sm:$0xf]
    %v75 = vld [vmem:[#allocation5 + $0x64] sm:$0xf]
    %v76 = vld [vmem:[#allocation5 + $0x68] sm:$0xf]
    %v77 = vld [vmem:[#allocation5 + $0x6c] sm:$0xf]
    %v78 = vld [vmem:[#allocation5 + $0x70] sm:$0xf]
    %v79 = vld [vmem:[#allocation5 + $0x74] sm:$0xf]
    %v80 = vld [vmem:[#allocation5 + $0x78] sm:$0xf]
    %v81 = vld [vmem:[#allocation5 + $0x7c] sm:$0xf]
    %v82 = vld [vmem:[#allocation5 + $0x80] sm:$0xf]
    %v83 = vld [vmem:[#allocation5 + $0x84] sm:$0xf]
    %v84 = vld [vmem:[#allocation5 + $0x88] sm:$0xf]
    %v85 = vld [vmem:[#allocation5 + $0x8c] sm:$0xf]
    %v86 = vld [vmem:[#allocation5 + $0x90] sm:$0xf]
    %v87 = vld [vmem:[#allocation5 + $0x94] sm:$0xf]
    %v88 = vld [vmem:[#allocation5 + $0x98] sm:$0xf]
    %v89 = vld [vmem:[#allocation5 + $0x9c] sm:$0xf]
    %v90 = vld [vmem:[#allocation5 + $0xa0] sm:$0xf]
    %v91 = vld [vmem:[#allocation5 + $0xa4] sm:$0xf]
    %v92 = vld [vmem:[#allocation5 + $0xa8] sm:$0xf]
    %v93 = vld [vmem:[#allocation5 + $0xac] sm:$0xf]
    %v94 = vld [vmem:[#allocation5 + $0xb0] sm:$0xf]
    %v95 = vld [vmem:[#allocation5 + $0xb4] sm:$0xf]
    %v96 = vld [vmem:[#allocation5 + $0xb8] sm:$0xf]
    %v97 = vld [vmem:[#allocation5 + $0xbc] sm:$0xf]
    %v98 = vld [vmem:[#allocation5 + $0xc0] sm:$0xf]
    %v99 = vld [vmem:[#allocation5 + $0xc4] sm:$0xf]
    %v100 = vld [vmem:[#allocation5 + $0xc8] sm:$0xf]
    %v101 = vld [vmem:[#allocation5 + $0xcc] sm:$0xf]
    %v102 = vld [vmem:[#allocation5 + $0xd0] sm:$0xf]
    %v103 = vld [vmem:[#allocation5 + $0xd4] sm:$0xf]
    %v104 = vld [vmem:[#allocation5 + $0xd8] sm:$0xf]
    %v105 = vld [vmem:[#allocation5 + $0xdc] sm:$0xf]
    %v106 = vld [vmem:[#allocation5 + $0xe0] sm:$0xf]
    %v107 = vld [vmem:[#allocation5 + $0xe4] sm:$0xf]
    %v108 = vld [vmem:[#allocation5 + $0xe8] sm:$0xf]
    %v109 = vld [vmem:[#allocation5 + $0xec] sm:$0xf]
    %v110 = vld [vmem:[#allocation5 + $0xf0] sm:$0xf]
    %v111 = vld [vmem:[#allocation5 + $0xf4] sm:$0xf]
    %v112 = vld [vmem:[#allocation5 + $0xf8] sm:$0xf]
    %v113 = vld [vmem:[#allocation5 + $0xfc] sm:$0xf]
    %v114 = vld [vmem:[#allocation5 + $0x100] sm:$0xf]
    %v115 = vld [vmem:[#allocation5 + $0x104] sm:$0xf]
    %v116 = vld [vmem:[#allocation5 + $0x108] sm:$0xf]
    %v117 = vld [vmem:[#allocation5 + $0x10c] sm:$0xf]
    %v118 = vld [vmem:[#allocation5 + $0x110] sm:$0xf]
    %v119 = vld [vmem:[#allocation5 + $0x114] sm:$0xf]
    %v120 = vld [vmem:[#allocation5 + $0x118] sm:$0xf]
    %v121 = vld [vmem:[#allocation5 + $0x11c] sm:$0xf]
    %v122 = vld [vmem:[#allocation5 + $0x120] sm:$0xf]
    %v123 = vld [vmem:[#allocation5 + $0x124] sm:$0xf]
    %v124 = vld [vmem:[#allocation5 + $0x128] sm:$0xf]
    %v125 = vld [vmem:[#allocation5 + $0x12c] sm:$0xf]
    %v126 = vld [vmem:[#allocation5 + $0x130] sm:$0xf]
    %v127 = vld [vmem:[#allocation5 + $0x134] sm:$0xf]
    %v128 = vld [vmem:[#allocation5 + $0x138] sm:$0xf]
    %v129 = vld [vmem:[#allocation5 + $0x13c] sm:$0xf]
    %v130 = vld [vmem:[#allocation5 + $0x140] sm:$0xf]
    %v131 = vld [vmem:[#allocation5 + $0x144] sm:$0xf]
    %v132 = vld [vmem:[#allocation5 + $0x148] sm:$0xf]
    %v133 = vld [vmem:[#allocation5 + $0x14c] sm:$0xf]
    %v134 = vld [vmem:[#allocation5 + $0x150] sm:$0xf]
    %v135 = vld [vmem:[#allocation5 + $0x154] sm:$0xf]
    %v136 = vld [vmem:[#allocation5 + $0x158] sm:$0xf]
    %v137 = vld [vmem:[#allocation5 + $0x15c] sm:$0xf]
    %v138 = vld [vmem:[#allocation5 + $0x160] sm:$0xf]
    %v139 = vld [vmem:[#allocation5 + $0x164] sm:$0xf]
    %v140 = vld [vmem:[#allocation5 + $0x168] sm:$0xf]
    %v141 = vld [vmem:[#allocation5 + $0x16c] sm:$0xf]
    %v142 = vld [vmem:[#allocation5 + $0x170] sm:$0xf]
    %v143 = vld [vmem:[#allocation5 + $0x174] sm:$0xf]
    %v144 = vld [vmem:[#allocation5 + $0x178] sm:$0xf]
    %v145 = vld [vmem:[#allocation5 + $0x17c] sm:$0xf]
    %v146 = vld [vmem:[#allocation5 + $0x180] sm:$0xf]
    %v147 = vld [vmem:[#allocation5 + $0x184] sm:$0xf]
    %v148 = vld [vmem:[#allocation5 + $0x188] sm:$0xf]
    %v149 = vld [vmem:[#allocation5 + $0x18c] sm:$0xf]
    %v150 = vld [vmem:[#allocation5 + $0x190] sm:$0xf]
    %v151 = vld [vmem:[#allocation5 + $0x194] sm:$0xf]
    %v152 = vld [vmem:[#allocation5 + $0x198] sm:$0xf]
    %v153 = vld [vmem:[#allocation5 + $0x19c] sm:$0xf]
    %v154 = vld [vmem:[#allocation5 + $0x1a0] sm:$0xf]
    %v155 = vld [vmem:[#allocation5 + $0x1a4] sm:$0xf]
    %v156 = vld [vmem:[#allocation5 + $0x1a8] sm:$0xf]
    %v157 = vld [vmem:[#allocation5 + $0x1ac] sm:$0xf]
    %v158 = vld [vmem:[#allocation5 + $0x1b0] sm:$0xf]
    %v159 = vld [vmem:[#allocation5 + $0x1b4] sm:$0xf]
    %v160 = vld [vmem:[#allocation5 + $0x1b8] sm:$0xf]
    %v161 = vld [vmem:[#allocation5 + $0x1bc] sm:$0xf]
    %v162 = vld [vmem:[#allocation5 + $0x1c0] sm:$0xf]
    %v163 = vld [vmem:[#allocation5 + $0x1c4] sm:$0xf]
    %v164 = vld [vmem:[#allocation5 + $0x1c8] sm:$0xf]
    %v165 = vld [vmem:[#allocation5 + $0x1cc] sm:$0xf]
    %v166 = vld [vmem:[#allocation5 + $0x1d0] sm:$0xf]
    %v167 = vld [vmem:[#allocation5 + $0x1d4] sm:$0xf]
    %v168 = vld [vmem:[#allocation5 + $0x1d8] sm:$0xf]
    %v169 = vld [vmem:[#allocation5 + $0x1dc] sm:$0xf]
    %v170 = vld [vmem:[#allocation5 + $0x1e0] sm:$0xf]
    %v171 = vld [vmem:[#allocation5 + $0x1e4] sm:$0xf]
    %v172 = vld [vmem:[#allocation5 + $0x1e8] sm:$0xf]
    %v173 = vld [vmem:[#allocation5 + $0x1ec] sm:$0xf]
    %v174 = vld [vmem:[#allocation5 + $0x1f0] sm:$0xf]
    %v175 = vld [vmem:[#allocation5 + $0x1f4] sm:$0xf]
    %v176 = vld [vmem:[#allocation5 + $0x1f8] sm:$0xf]
    %v177 = vld [vmem:[#allocation5 + $0x1fc] sm:$0xf]
    %v178 = vld [vmem:[#allocation5 + $0x200] sm:$0xf]
    %v179 = vld [vmem:[#allocation5 + $0x204] sm:$0xf]
    %v180 = vld [vmem:[#allocation5 + $0x208] sm:$0xf]
    %v181 = vld [vmem:[#allocation5 + $0x20c] sm:$0xf]
    %v182 = vld [vmem:[#allocation5 + $0x210] sm:$0xf]
    %v183 = vld [vmem:[#allocation5 + $0x214] sm:$0xf]
    %v184 = vld [vmem:[#allocation5 + $0x218] sm:$0xf]
    %v185 = vld [vmem:[#allocation5 + $0x21c] sm:$0xf]
    %v186 = vld [vmem:[#allocation5 + $0x220] sm:$0xf]
    %v187 = vld [vmem:[#allocation5 + $0x224] sm:$0xf]
    %v188 = vld [vmem:[#allocation5 + $0x228] sm:$0xf]
    %v189 = vld [vmem:[#allocation5 + $0x22c] sm:$0xf]
    %v190 = vld [vmem:[#allocation5 + $0x230] sm:$0xf]
    %v191 = vld [vmem:[#allocation5 + $0x234] sm:$0xf]
    %v192 = vld [vmem:[#allocation5 + $0x238] sm:$0xf]
    %v193 = vld [vmem:[#allocation5 + $0x23c] sm:$0xf]
    %v194 = vld [vmem:[#allocation5 + $0x240] sm:$0xf]
    %v195 = vld [vmem:[#allocation5 + $0x244] sm:$0xf]
    %v196 = vld [vmem:[#allocation5 + $0x248] sm:$0xf]
    %v197 = vld [vmem:[#allocation5 + $0x24c] sm:$0xf]
    %v198 = vld [vmem:[#allocation5 + $0x250] sm:$0xf]
    %v199 = vld [vmem:[#allocation5 + $0x254] sm:$0xf]
    %v200 = vld [vmem:[#allocation5 + $0x258] sm:$0xf]
    %v201 = vld [vmem:[#allocation5 + $0x25c] sm:$0xf]
    %v202 = vld [vmem:[#allocation5 + $0x260] sm:$0xf]
    %v203 = vld [vmem:[#allocation5 + $0x264] sm:$0xf]
    %v204 = vld [vmem:[#allocation5 + $0x268] sm:$0xf]
    %v205 = vld [vmem:[#allocation5 + $0x26c] sm:$0xf]
    %v206 = vld [vmem:[#allocation5 + $0x270] sm:$0xf]
    %v207 = vld [vmem:[#allocation5 + $0x274] sm:$0xf]
    %v208 = vld [vmem:[#allocation5 + $0x278] sm:$0xf]
    %v209 = vld [vmem:[#allocation5 + $0x27c] sm:$0xf]
    %v210 = vld [vmem:[#allocation5 + $0x280] sm:$0xf]
    %v211 = vld [vmem:[#allocation5 + $0x284] sm:$0xf]
    %v212 = vld [vmem:[#allocation5 + $0x288] sm:$0xf]
    %v213 = vld [vmem:[#allocation5 + $0x28c] sm:$0xf]
    %v214 = vld [vmem:[#allocation5 + $0x290] sm:$0xf]
    %v215 = vld [vmem:[#allocation5 + $0x294] sm:$0xf]
    %v216 = vld [vmem:[#allocation5 + $0x298] sm:$0xf]
    %v217 = vld [vmem:[#allocation5 + $0x29c] sm:$0xf]
    %v218 = vld [vmem:[#allocation5 + $0x2a0] sm:$0xf]
    %v219 = vld [vmem:[#allocation5 + $0x2a4] sm:$0xf]
    %v220 = vld [vmem:[#allocation5 + $0x2a8] sm:$0xf]
    %v221 = vld [vmem:[#allocation5 + $0x2ac] sm:$0xf]
    %v222 = vld [vmem:[#allocation5 + $0x2b0] sm:$0xf]
    %v223 = vld [vmem:[#allocation5 + $0x2b4] sm:$0xf]
    %v224 = vld [vmem:[#allocation5 + $0x2b8] sm:$0xf]
    %v225 = vld [vmem:[#allocation5 + $0x2bc] sm:$0xf]
    %v226 = vld [vmem:[#allocation5 + $0x2c0] sm:$0xf]
    %v227 = vld [vmem:[#allocation5 + $0x2c4] sm:$0xf]
    %v228 = vld [vmem:[#allocation5 + $0x2c8] sm:$0xf]
    %v229 = vld [vmem:[#allocation5 + $0x2cc] sm:$0xf]
    %v230 = vld [vmem:[#allocation5 + $0x2d0] sm:$0xf]
    %v231 = vld [vmem:[#allocation5 + $0x2d4] sm:$0xf]
    %v232 = vld [vmem:[#allocation5 + $0x2d8] sm:$0xf]
    %v233 = vld [vmem:[#allocation5 + $0x2dc] sm:$0xf]
    %v234 = vld [vmem:[#allocation5 + $0x2e0] sm:$0xf]
    %v235 = vld [vmem:[#allocation5 + $0x2e4] sm:$0xf]
    %v236 = vld [vmem:[#allocation5 + $0x2e8] sm:$0xf]
    %v237 = vld [vmem:[#allocation5 + $0x2ec] sm:$0xf]
    %v238 = vld [vmem:[#allocation5 + $0x2f0] sm:$0xf]
    %v239 = vld [vmem:[#allocation5 + $0x2f4] sm:$0xf]
    %v240 = vld [vmem:[#allocation5 + $0x2f8] sm:$0xf]
    %v241 = vld [vmem:[#allocation5 + $0x2fc] sm:$0xf]
    %v242 = vld [vmem:[#allocation5 + $0x300] sm:$0xf]
    %v243 = vld [vmem:[#allocation5 + $0x304] sm:$0xf]
    %v244 = vld [vmem:[#allocation5 + $0x308] sm:$0xf]
    %v245 = vld [vmem:[#allocation5 + $0x30c] sm:$0xf]
    %v246 = vld [vmem:[#allocation5 + $0x310] sm:$0xf]
    %v247 = vld [vmem:[#allocation5 + $0x314] sm:$0xf]
    %v248 = vld [vmem:[#allocation5 + $0x318] sm:$0xf]
    %v249 = vld [vmem:[#allocation5 + $0x31c] sm:$0xf]
    %v250 = vld [vmem:[#allocation5 + $0x320] sm:$0xf]
    %v251 = vld [vmem:[#allocation5 + $0x324] sm:$0xf]
    %v252 = vld [vmem:[#allocation5 + $0x328] sm:$0xf]
    %v253 = vld [vmem:[#allocation5 + $0x32c] sm:$0xf]
    %v254 = vld [vmem:[#allocation5 + $0x330] sm:$0xf]
    %v255 = vld [vmem:[#allocation5 + $0x334] sm:$0xf]
    %v256 = vld [vmem:[#allocation5 + $0x338] sm:$0xf]
    %v257 = vld [vmem:[#allocation5 + $0x33c] sm:$0xf]
    %v258 = vld [vmem:[#allocation5 + $0x340] sm:$0xf]
    %v259 = vld [vmem:[#allocation5 + $0x344] sm:$0xf]
    %v260 = vld [vmem:[#allocation5 + $0x348] sm:$0xf]
    %v261 = vld [vmem:[#allocation5 + $0x34c] sm:$0xf]
    %v262 = vld [vmem:[#allocation5 + $0x350] sm:$0xf]
    %v263 = vld [vmem:[#allocation5 + $0x354] sm:$0xf]
    %v264 = vld [vmem:[#allocation5 + $0x358] sm:$0xf]
    %v265 = vld [vmem:[#allocation5 + $0x35c] sm:$0xf]
    %v266 = vld [vmem:[#allocation5 + $0x360] sm:$0xf]
    %v267 = vld [vmem:[#allocation5 + $0x364] sm:$0xf]
    %v268 = vld [vmem:[#allocation5 + $0x368] sm:$0xf]
    %v269 = vld [vmem:[#allocation5 + $0x36c] sm:$0xf]
    %v270 = vld [vmem:[#allocation5 + $0x370] sm:$0xf]
    %v271 = vld [vmem:[#allocation5 + $0x374] sm:$0xf]
    %v272 = vld [vmem:[#allocation5 + $0x378] sm:$0xf]
    %v273 = vld [vmem:[#allocation5 + $0x37c] sm:$0xf]
    %v274 = vld [vmem:[#allocation5 + $0x380] sm:$0xf]
    %v275 = vld [vmem:[#allocation5 + $0x384] sm:$0xf]
    %v276 = vld [vmem:[#allocation5 + $0x388] sm:$0xf]
    %v277 = vld [vmem:[#allocation5 + $0x38c] sm:$0xf]
    %v278 = vld [vmem:[#allocation5 + $0x390] sm:$0xf]
    %v279 = vld [vmem:[#allocation5 + $0x394] sm:$0xf]
    %v280 = vld [vmem:[#allocation5 + $0x398] sm:$0xf]
    %v281 = vld [vmem:[#allocation5 + $0x39c] sm:$0xf]
    %v282 = vld [vmem:[#allocation5 + $0x3a0] sm:$0xf]
    %v283 = vld [vmem:[#allocation5 + $0x3a4] sm:$0xf]
    %v284 = vld [vmem:[#allocation5 + $0x3a8] sm:$0xf]
    %v285 = vld [vmem:[#allocation5 + $0x3ac] sm:$0xf]
    %v286 = vld [vmem:[#allocation5 + $0x3b0] sm:$0xf]
    %v287 = vld [vmem:[#allocation5 + $0x3b4] sm:$0xf]
    %v288 = vld [vmem:[#allocation5 + $0x3b8] sm:$0xf]
    %v289 = vld [vmem:[#allocation5 + $0x3bc] sm:$0xf]
    %v290 = vld [vmem:[#allocation5 + $0x3c0] sm:$0xf]
    %v291 = vld [vmem:[#allocation5 + $0x3c4] sm:$0xf]
    %v292 = vld [vmem:[#allocation5 + $0x3c8] sm:$0xf]
    %v293 = vld [vmem:[#allocation5 + $0x3cc] sm:$0xf]
    %v294 = vld [vmem:[#allocation5 + $0x3d0] sm:$0xf]
    %v295 = vld [vmem:[#allocation5 + $0x3d4] sm:$0xf]
    %v296 = vld [vmem:[#allocation5 + $0x3d8] sm:$0xf]
    %v297 = vld [vmem:[#allocation5 + $0x3dc] sm:$0xf]
    %v298 = vld [vmem:[#allocation5 + $0x3e0] sm:$0xf]
    %v299 = vld [vmem:[#allocation5 + $0x3e4] sm:$0xf]
    %v300 = vld [vmem:[#allocation5 + $0x3e8] sm:$0xf]
    %v301 = vld [vmem:[#allocation5 + $0x3ec] sm:$0xf]
    %v302 = vld [vmem:[#allocation5 + $0x3f0] sm:$0xf]
    %v303 = vld [vmem:[#allocation5 + $0x3f4] sm:$0xf]
    %v304 = vld [vmem:[#allocation5 + $0x3f8] sm:$0xf]
    %v305 = vld [vmem:[#allocation5 + $0x3fc] sm:$0xf]
    %v306 = vld [vmem:[%s2] sm:$0x1]
    %v308 = vlaneseq
    %v309 = vshrl.u32 %v308, 7
    %v310 = vsub.s32 0, %v309
    %v311 = vrot.slane %v306, %v310
    %v321 = vunpack.c.l.b16 %v42
    %v322 = vunpack.c.h.b16 %v42
    %v323 = vunpack.c.l.b16 %v43
    %v324 = vunpack.c.h.b16 %v43
    %v325 = vunpack.c.l.b16 %v44
    %v326 = vunpack.c.h.b16 %v44
    %v327 = vunpack.c.l.b16 %v45
    %v328 = vunpack.c.h.b16 %v45
    %v329 = vunpack.c.l.b16 %v46
    %v330 = vunpack.c.h.b16 %v46
    %v331 = vunpack.c.l.b16 %v47
    %v332 = vunpack.c.h.b16 %v47
    %v333 = vunpack.c.l.b16 %v48
    %v334 = vunpack.c.h.b16 %v48
    %v335 = vunpack.c.l.b16 %v49
    %v336 = vunpack.c.h.b16 %v49
    %v337 = vpack.c.b16 %v321, %v321
    %v338 = vpack.c.b16 %v322, %v322
    %v339 = vpack.c.b16 %v323, %v323
    %v340 = vpack.c.b16 %v324, %v324
    %v341 = vpack.c.b16 %v325, %v325
    %v342 = vpack.c.b16 %v326, %v326
    %v343 = vpack.c.b16 %v327, %v327
    %v344 = vpack.c.b16 %v328, %v328
    %v345 = vpack.c.b16 %v329, %v329
    %v346 = vpack.c.b16 %v330, %v330
    %v347 = vpack.c.b16 %v331, %v331
    %v348 = vpack.c.b16 %v332, %v332
    %v349 = vpack.c.b16 %v333, %v333
    %v350 = vpack.c.b16 %v334, %v334
    %v351 = vpack.c.b16 %v335, %v335
    %v352 = vpack.c.b16 %v336, %v336
    %v625 = vunpack.c.l.b16 %v50
    %v626 = vunpack.c.l.b16 %v51
    %v627 = vunpack.c.l.b16 %v52
    %v628 = vunpack.c.l.b16 %v53
    %v629 = vunpack.c.l.b16 %v54
    %v630 = vunpack.c.l.b16 %v55
    %v631 = vunpack.c.l.b16 %v56
    %v632 = vunpack.c.l.b16 %v57
    %v633 = vunpack.c.l.b16 %v58
    %v634 = vunpack.c.l.b16 %v59
    %v635 = vunpack.c.l.b16 %v60
    %v636 = vunpack.c.l.b16 %v61
    %v637 = vunpack.c.l.b16 %v62
    %v638 = vunpack.c.l.b16 %v63
    %v639 = vunpack.c.l.b16 %v64
    %v640 = vunpack.c.l.b16 %v65
    %v641 = vunpack.c.l.b16 %v66
    %v642 = vunpack.c.l.b16 %v67
    %v643 = vunpack.c.l.b16 %v68
    %v644 = vunpack.c.l.b16 %v69
    %v645 = vunpack.c.l.b16 %v70
    %v646 = vunpack.c.l.b16 %v71
    %v647 = vunpack.c.l.b16 %v72
    %v648 = vunpack.c.l.b16 %v73
    %v649 = vunpack.c.l.b16 %v74
    %v650 = vunpack.c.l.b16 %v75
    %v651 = vunpack.c.l.b16 %v76
    %v652 = vunpack.c.l.b16 %v77
    %v653 = vunpack.c.l.b16 %v78
    %v654 = vunpack.c.l.b16 %v79
    %v655 = vunpack.c.l.b16 %v80
    %v656 = vunpack.c.l.b16 %v81
    %v657 = vunpack.c.l.b16 %v82
    %v658 = vunpack.c.l.b16 %v83
    %v659 = vunpack.c.l.b16 %v84
    %v660 = vunpack.c.l.b16 %v85
    %v661 = vunpack.c.l.b16 %v86
    %v662 = vunpack.c.l.b16 %v87
    %v663 = vunpack.c.l.b16 %v88
    %v664 = vunpack.c.l.b16 %v89
    %v665 = vunpack.c.l.b16 %v90
    %v666 = vunpack.c.l.b16 %v91
    %v667 = vunpack.c.l.b16 %v92
    %v668 = vunpack.c.l.b16 %v93
    %v669 = vunpack.c.l.b16 %v94
    %v670 = vunpack.c.l.b16 %v95
    %v671 = vunpack.c.l.b16 %v96
    %v672 = vunpack.c.l.b16 %v97
    %v673 = vunpack.c.l.b16 %v98
    %v674 = vunpack.c.l.b16 %v99
    %v675 = vunpack.c.l.b16 %v100
    %v676 = vunpack.c.l.b16 %v101
    %v677 = vunpack.c.l.b16 %v102
    %v678 = vunpack.c.l.b16 %v103
    %v679 = vunpack.c.l.b16 %v104
    %v680 = vunpack.c.l.b16 %v105
    %v681 = vunpack.c.l.b16 %v106
    %v682 = vunpack.c.l.b16 %v107
    %v683 = vunpack.c.l.b16 %v108
    %v684 = vunpack.c.l.b16 %v109
    %v685 = vunpack.c.l.b16 %v110
    %v686 = vunpack.c.l.b16 %v111
    %v687 = vunpack.c.l.b16 %v112
    %v688 = vunpack.c.l.b16 %v113
    %v689 = vunpack.c.l.b16 %v114
    %v690 = vunpack.c.l.b16 %v115
    %v691 = vunpack.c.l.b16 %v116
    %v692 = vunpack.c.l.b16 %v117
    %v693 = vunpack.c.l.b16 %v118
    %v694 = vunpack.c.l.b16 %v119
    %v695 = vunpack.c.l.b16 %v120
    %v696 = vunpack.c.l.b16 %v121
    %v697 = vunpack.c.l.b16 %v122
    %v698 = vunpack.c.l.b16 %v123
    %v699 = vunpack.c.l.b16 %v124
    %v700 = vunpack.c.l.b16 %v125
    %v701 = vunpack.c.l.b16 %v126
    %v702 = vunpack.c.l.b16 %v127
    %v703 = vunpack.c.l.b16 %v128
    %v704 = vunpack.c.l.b16 %v129
    %v705 = vunpack.c.l.b16 %v130
    %v706 = vunpack.c.l.b16 %v131
    %v707 = vunpack.c.l.b16 %v132
    %v708 = vunpack.c.l.b16 %v133
    %v709 = vunpack.c.l.b16 %v134
    %v710 = vunpack.c.l.b16 %v135
    %v711 = vunpack.c.l.b16 %v136
    %v712 = vunpack.c.l.b16 %v137
    %v713 = vunpack.c.l.b16 %v138
    %v714 = vunpack.c.l.b16 %v139
    %v715 = vunpack.c.l.b16 %v140
    %v716 = vunpack.c.l.b16 %v141
    %v717 = vunpack.c.l.b16 %v142
    %v718 = vunpack.c.l.b16 %v143
    %v719 = vunpack.c.l.b16 %v144
    %v720 = vunpack.c.l.b16 %v145
    %v721 = vunpack.c.l.b16 %v146
    %v722 = vunpack.c.l.b16 %v147
    %v723 = vunpack.c.l.b16 %v148
    %v724 = vunpack.c.l.b16 %v149
    %v725 = vunpack.c.l.b16 %v150
    %v726 = vunpack.c.l.b16 %v151
    %v727 = vunpack.c.l.b16 %v152
    %v728 = vunpack.c.l.b16 %v153
    %v729 = vunpack.c.l.b16 %v154
    %v730 = vunpack.c.l.b16 %v155
    %v731 = vunpack.c.l.b16 %v156
    %v732 = vunpack.c.l.b16 %v157
    %v733 = vunpack.c.l.b16 %v158
    %v734 = vunpack.c.l.b16 %v159
    %v735 = vunpack.c.l.b16 %v160
    %v736 = vunpack.c.l.b16 %v161
    %v737 = vunpack.c.l.b16 %v162
    %v738 = vunpack.c.l.b16 %v163
    %v739 = vunpack.c.l.b16 %v164
    %v740 = vunpack.c.l.b16 %v165
    %v741 = vunpack.c.l.b16 %v166
    %v742 = vunpack.c.l.b16 %v167
    %v743 = vunpack.c.l.b16 %v168
    %v744 = vunpack.c.l.b16 %v169
    %v745 = vunpack.c.l.b16 %v170
    %v746 = vunpack.c.l.b16 %v171
    %v747 = vunpack.c.l.b16 %v172
    %v748 = vunpack.c.l.b16 %v173
    %v749 = vunpack.c.l.b16 %v174
    %v750 = vunpack.c.l.b16 %v175
    %v751 = vunpack.c.l.b16 %v176
    %v752 = vunpack.c.l.b16 %v177
    %v753 = vunpack.c.l.b16 %v178
    %v754 = vunpack.c.l.b16 %v179
    %v755 = vunpack.c.l.b16 %v180
    %v756 = vunpack.c.l.b16 %v181
    %v757 = vunpack.c.l.b16 %v182
    %v758 = vunpack.c.l.b16 %v183
    %v759 = vunpack.c.l.b16 %v184
    %v760 = vunpack.c.l.b16 %v185
    %v761 = vunpack.c.l.b16 %v186
    %v762 = vunpack.c.l.b16 %v187
    %v763 = vunpack.c.l.b16 %v188
    %v764 = vunpack.c.l.b16 %v189
    %v765 = vunpack.c.l.b16 %v190
    %v766 = vunpack.c.l.b16 %v191
    %v767 = vunpack.c.l.b16 %v192
    %v768 = vunpack.c.l.b16 %v193
    %v769 = vunpack.c.l.b16 %v194
    %v770 = vunpack.c.l.b16 %v195
    %v771 = vunpack.c.l.b16 %v196
    %v772 = vunpack.c.l.b16 %v197
    %v773 = vunpack.c.l.b16 %v198
    %v774 = vunpack.c.l.b16 %v199
    %v775 = vunpack.c.l.b16 %v200
    %v776 = vunpack.c.l.b16 %v201
    %v777 = vunpack.c.l.b16 %v202
    %v778 = vunpack.c.l.b16 %v203
    %v779 = vunpack.c.l.b16 %v204
    %v780 = vunpack.c.l.b16 %v205
    %v781 = vunpack.c.l.b16 %v206
    %v782 = vunpack.c.l.b16 %v207
    %v783 = vunpack.c.l.b16 %v208
    %v784 = vunpack.c.l.b16 %v209
    %v785 = vunpack.c.l.b16 %v210
    %v786 = vunpack.c.l.b16 %v211
    %v787 = vunpack.c.l.b16 %v212
    %v788 = vunpack.c.l.b16 %v213
    %v789 = vunpack.c.l.b16 %v214
    %v790 = vunpack.c.l.b16 %v215
    %v791 = vunpack.c.l.b16 %v216
    %v792 = vunpack.c.l.b16 %v217
    %v793 = vunpack.c.l.b16 %v218
    %v794 = vunpack.c.l.b16 %v219
    %v795 = vunpack.c.l.b16 %v220
    %v796 = vunpack.c.l.b16 %v221
    %v797 = vunpack.c.l.b16 %v222
    %v798 = vunpack.c.l.b16 %v223
    %v799 = vunpack.c.l.b16 %v224
    %v800 = vunpack.c.l.b16 %v225
    %v801 = vunpack.c.l.b16 %v226
    %v802 = vunpack.c.l.b16 %v227
    %v803 = vunpack.c.l.b16 %v228
    %v804 = vunpack.c.l.b16 %v229
    %v805 = vunpack.c.l.b16 %v230
    %v806 = vunpack.c.l.b16 %v231
    %v807 = vunpack.c.l.b16 %v232
    %v808 = vunpack.c.l.b16 %v233
    %v809 = vunpack.c.l.b16 %v234
    %v810 = vunpack.c.l.b16 %v235
    %v811 = vunpack.c.l.b16 %v236
    %v812 = vunpack.c.l.b16 %v237
    %v813 = vunpack.c.l.b16 %v238
    %v814 = vunpack.c.l.b16 %v239
    %v815 = vunpack.c.l.b16 %v240
    %v816 = vunpack.c.l.b16 %v241
    %v817 = vunpack.c.l.b16 %v242
    %v818 = vunpack.c.l.b16 %v243
    %v819 = vunpack.c.l.b16 %v244
    %v820 = vunpack.c.l.b16 %v245
    %v821 = vunpack.c.l.b16 %v246
    %v822 = vunpack.c.l.b16 %v247
    %v823 = vunpack.c.l.b16 %v248
    %v824 = vunpack.c.l.b16 %v249
    %v825 = vunpack.c.l.b16 %v250
    %v826 = vunpack.c.l.b16 %v251
    %v827 = vunpack.c.l.b16 %v252
    %v828 = vunpack.c.l.b16 %v253
    %v829 = vunpack.c.l.b16 %v254
    %v830 = vunpack.c.l.b16 %v255
    %v831 = vunpack.c.l.b16 %v256
    %v832 = vunpack.c.l.b16 %v257
    %v833 = vunpack.c.l.b16 %v258
    %v834 = vunpack.c.l.b16 %v259
    %v835 = vunpack.c.l.b16 %v260
    %v836 = vunpack.c.l.b16 %v261
    %v837 = vunpack.c.l.b16 %v262
    %v838 = vunpack.c.l.b16 %v263
    %v839 = vunpack.c.l.b16 %v264
    %v840 = vunpack.c.l.b16 %v265
    %v841 = vunpack.c.l.b16 %v266
    %v842 = vunpack.c.l.b16 %v267
    %v843 = vunpack.c.l.b16 %v268
    %v844 = vunpack.c.l.b16 %v269
    %v845 = vunpack.c.l.b16 %v270
    %v846 = vunpack.c.l.b16 %v271
    %v847 = vunpack.c.l.b16 %v272
    %v848 = vunpack.c.l.b16 %v273
    %v849 = vunpack.c.l.b16 %v274
    %v850 = vunpack.c.l.b16 %v275
    %v851 = vunpack.c.l.b16 %v276
    %v852 = vunpack.c.l.b16 %v277
    %v853 = vunpack.c.l.b16 %v278
    %v854 = vunpack.c.l.b16 %v279
    %v855 = vunpack.c.l.b16 %v280
    %v856 = vunpack.c.l.b16 %v281
    %v857 = vunpack.c.l.b16 %v282
    %v858 = vunpack.c.l.b16 %v283
    %v859 = vunpack.c.l.b16 %v284
    %v860 = vunpack.c.l.b16 %v285
    %v861 = vunpack.c.l.b16 %v286
    %v862 = vunpack.c.l.b16 %v287
    %v863 = vunpack.c.l.b16 %v288
    %v864 = vunpack.c.l.b16 %v289
    %v865 = vunpack.c.l.b16 %v290
    %v866 = vunpack.c.l.b16 %v291
    %v867 = vunpack.c.l.b16 %v292
    %v868 = vunpack.c.l.b16 %v293
    %v869 = vunpack.c.l.b16 %v294
    %v870 = vunpack.c.l.b16 %v295
    %v871 = vunpack.c.l.b16 %v296
    %v872 = vunpack.c.l.b16 %v297
    %v873 = vunpack.c.l.b16 %v298
    %v874 = vunpack.c.l.b16 %v299
    %v875 = vunpack.c.l.b16 %v300
    %v876 = vunpack.c.l.b16 %v301
    %v877 = vunpack.c.l.b16 %v302
    %v878 = vunpack.c.l.b16 %v303
    %v879 = vunpack.c.l.b16 %v304
    %v880 = vunpack.c.l.b16 %v305
    %v881 = vpack.c.b16 %v626, %v625
    %v882 = vpack.c.b16 %v628, %v627
    %v883 = vpack.c.b16 %v630, %v629
    %v884 = vpack.c.b16 %v632, %v631
    %v885 = vpack.c.b16 %v634, %v633
    %v886 = vpack.c.b16 %v636, %v635
    %v887 = vpack.c.b16 %v638, %v637
    %v888 = vpack.c.b16 %v640, %v639
    %v889 = vpack.c.b16 %v642, %v641
    %v890 = vpack.c.b16 %v644, %v643
    %v891 = vpack.c.b16 %v646, %v645
    %v892 = vpack.c.b16 %v648, %v647
    %v893 = vpack.c.b16 %v650, %v649
    %v894 = vpack.c.b16 %v652, %v651
    %v895 = vpack.c.b16 %v654, %v653
    %v896 = vpack.c.b16 %v656, %v655
    %v897 = vpack.c.b16 %v658, %v657
    %v898 = vpack.c.b16 %v660, %v659
    %v899 = vpack.c.b16 %v662, %v661
    %v900 = vpack.c.b16 %v664, %v663
    %v901 = vpack.c.b16 %v666, %v665
    %v902 = vpack.c.b16 %v668, %v667
    %v903 = vpack.c.b16 %v670, %v669
    %v904 = vpack.c.b16 %v672, %v671
    %v905 = vpack.c.b16 %v674, %v673
    %v906 = vpack.c.b16 %v676, %v675
    %v907 = vpack.c.b16 %v678, %v677
    %v908 = vpack.c.b16 %v680, %v679
    %v909 = vpack.c.b16 %v682, %v681
    %v910 = vpack.c.b16 %v684, %v683
    %v911 = vpack.c.b16 %v686, %v685
    %v912 = vpack.c.b16 %v688, %v687
    %v913 = vpack.c.b16 %v690, %v689
    %v914 = vpack.c.b16 %v692, %v691
    %v915 = vpack.c.b16 %v694, %v693
    %v916 = vpack.c.b16 %v696, %v695
    %v917 = vpack.c.b16 %v698, %v697
    %v918 = vpack.c.b16 %v700, %v699
    %v919 = vpack.c.b16 %v702, %v701
    %v920 = vpack.c.b16 %v704, %v703
    %v921 = vpack.c.b16 %v706, %v705
    %v922 = vpack.c.b16 %v708, %v707
    %v923 = vpack.c.b16 %v710, %v709
    %v924 = vpack.c.b16 %v712, %v711
    %v925 = vpack.c.b16 %v714, %v713
    %v926 = vpack.c.b16 %v716, %v715
    %v927 = vpack.c.b16 %v718, %v717
    %v928 = vpack.c.b16 %v720, %v719
    %v929 = vpack.c.b16 %v722, %v721
    %v930 = vpack.c.b16 %v724, %v723
    %v931 = vpack.c.b16 %v726, %v725
    %v932 = vpack.c.b16 %v728, %v727
    %v933 = vpack.c.b16 %v730, %v729
    %v934 = vpack.c.b16 %v732, %v731
    %v935 = vpack.c.b16 %v734, %v733
    %v936 = vpack.c.b16 %v736, %v735
    %v937 = vpack.c.b16 %v738, %v737
    %v938 = vpack.c.b16 %v740, %v739
    %v939 = vpack.c.b16 %v742, %v741
    %v940 = vpack.c.b16 %v744, %v743
    %v941 = vpack.c.b16 %v746, %v745
    %v942 = vpack.c.b16 %v748, %v747
    %v943 = vpack.c.b16 %v750, %v749
    %v944 = vpack.c.b16 %v752, %v751
    %v945 = vpack.c.b16 %v754, %v753
    %v946 = vpack.c.b16 %v756, %v755
    %v947 = vpack.c.b16 %v758, %v757
    %v948 = vpack.c.b16 %v760, %v759
    %v949 = vpack.c.b16 %v762, %v761
    %v950 = vpack.c.b16 %v764, %v763
    %v951 = vpack.c.b16 %v766, %v765
    %v952 = vpack.c.b16 %v768, %v767
    %v953 = vpack.c.b16 %v770, %v769
    %v954 = vpack.c.b16 %v772, %v771
    %v955 = vpack.c.b16 %v774, %v773
    %v956 = vpack.c.b16 %v776, %v775
    %v957 = vpack.c.b16 %v778, %v777
    %v958 = vpack.c.b16 %v780, %v779
    %v959 = vpack.c.b16 %v782, %v781
    %v960 = vpack.c.b16 %v784, %v783
    %v961 = vpack.c.b16 %v786, %v785
    %v962 = vpack.c.b16 %v788, %v787
    %v963 = vpack.c.b16 %v790, %v789
    %v964 = vpack.c.b16 %v792, %v791
    %v965 = vpack.c.b16 %v794, %v793
    %v966 = vpack.c.b16 %v796, %v795
    %v967 = vpack.c.b16 %v798, %v797
    %v968 = vpack.c.b16 %v800, %v799
    %v969 = vpack.c.b16 %v802, %v801
    %v970 = vpack.c.b16 %v804, %v803
    %v971 = vpack.c.b16 %v806, %v805
    %v972 = vpack.c.b16 %v808, %v807
    %v973 = vpack.c.b16 %v810, %v809
    %v974 = vpack.c.b16 %v812, %v811
    %v975 = vpack.c.b16 %v814, %v813
    %v976 = vpack.c.b16 %v816, %v815
    %v977 = vpack.c.b16 %v818, %v817
    %v978 = vpack.c.b16 %v820, %v819
    %v979 = vpack.c.b16 %v822, %v821
    %v980 = vpack.c.b16 %v824, %v823
    %v981 = vpack.c.b16 %v826, %v825
    %v982 = vpack.c.b16 %v828, %v827
    %v983 = vpack.c.b16 %v830, %v829
    %v984 = vpack.c.b16 %v832, %v831
    %v985 = vpack.c.b16 %v834, %v833
    %v986 = vpack.c.b16 %v836, %v835
    %v987 = vpack.c.b16 %v838, %v837
    %v988 = vpack.c.b16 %v840, %v839
    %v989 = vpack.c.b16 %v842, %v841
    %v990 = vpack.c.b16 %v844, %v843
    %v991 = vpack.c.b16 %v846, %v845
    %v992 = vpack.c.b16 %v848, %v847
    %v993 = vpack.c.b16 %v850, %v849
    %v994 = vpack.c.b16 %v852, %v851
    %v995 = vpack.c.b16 %v854, %v853
    %v996 = vpack.c.b16 %v856, %v855
    %v997 = vpack.c.b16 %v858, %v857
    %v998 = vpack.c.b16 %v860, %v859
    %v999 = vpack.c.b16 %v862, %v861
    %v1000 = vpack.c.b16 %v864, %v863
    %v1001 = vpack.c.b16 %v866, %v865
    %v1002 = vpack.c.b16 %v868, %v867
    %v1003 = vpack.c.b16 %v870, %v869
    %v1004 = vpack.c.b16 %v872, %v871
    %v1005 = vpack.c.b16 %v874, %v873
    %v1006 = vpack.c.b16 %v876, %v875
    %v1007 = vpack.c.b16 %v878, %v877
    %v1008 = vpack.c.b16 %v880, %v879
    %1137 = vmatprep.subr.bf16.mxu0 0
    %1138 = vmatpush1.bf16.msra.mxu0 %v888
    %1139 = vmatprep.subr.bf16.mxu0 0
    %1140 = vmatpush1.bf16.msra.mxu0 %v887
    %1141 = vmatprep.subr.bf16.mxu0 0
    %1142 = vmatpush1.bf16.msra.mxu0 %v886
    %1143 = vmatprep.subr.bf16.mxu0 0
    %1144 = vmatpush1.bf16.msra.mxu0 %v885
    %1145 = vmatprep.subr.bf16.mxu0 0
    %1146 = vmatpush1.bf16.msra.mxu0 %v884
    %1147 = vmatprep.subr.bf16.mxu0 0
    %1148 = vmatpush1.bf16.msra.mxu0 %v883
    %1149 = vmatprep.subr.bf16.mxu0 0
    %1150 = vmatpush1.bf16.msra.mxu0 %v882
    %1151 = vmatprep.subr.bf16.mxu0 0
    %1152 = vmatpush1.bf16.msra.mxu0 %v881
    %1153 = vmatprep.subr.bf16.mxu0 0
    %1154 = vmatpush2.bf16.msra.mxu0 %v896
    %1155 = vmatprep.subr.bf16.mxu0 0
    %1156 = vmatpush2.bf16.msra.mxu0 %v895
    %1157 = vmatprep.subr.bf16.mxu0 0
    %1158 = vmatpush2.bf16.msra.mxu0 %v894
    %1159 = vmatprep.subr.bf16.mxu0 0
    %1160 = vmatpush2.bf16.msra.mxu0 %v893
    %1161 = vmatprep.subr.bf16.mxu0 0
    %1162 = vmatpush2.bf16.msra.mxu0 %v892
    %1163 = vmatprep.subr.bf16.mxu0 0
    %1164 = vmatpush2.bf16.msra.mxu0 %v891
    %1165 = vmatprep.subr.bf16.mxu0 0
    %1166 = vmatpush2.bf16.msra.mxu0 %v890
    %1167 = vmatprep.subr.bf16.mxu0 0
    %1168 = vmatpush2.bf16.msra.mxu0 %v889
    %1169 = vmatprep.mubr.bf16.mxu0 %v338
    %1170 = vmatmul.mubr.bf16.gmra.mxu0 %v337
    %v1171 = vpop.f32.mrf.mxu0
    %v1172 = vadd.f32 %v311, %v1171
    %v1173 = vpop.f32.mrf.mxu0
    %v1174 = vpop.f32.mrf.mxu0
    %v1175 = vpop.f32.mrf.mxu0
    %1176 = vdwg.mxu0
    %1177 = vmatprep.subr.bf16.mxu0 0
    %1178 = vmatpush1.bf16.msra.mxu0 %v904
    %1179 = vmatprep.subr.bf16.mxu0 0
    %1180 = vmatpush1.bf16.msra.mxu0 %v903
    %1181 = vmatprep.subr.bf16.mxu0 0
    %1182 = vmatpush1.bf16.msra.mxu0 %v902
    %1183 = vmatprep.subr.bf16.mxu0 0
    %1184 = vmatpush1.bf16.msra.mxu0 %v901
    %1185 = vmatprep.subr.bf16.mxu0 0
    %1186 = vmatpush1.bf16.msra.mxu0 %v900
    %1187 = vmatprep.subr.bf16.mxu0 0
    %1188 = vmatpush1.bf16.msra.mxu0 %v899
    %1189 = vmatprep.subr.bf16.mxu0 0
    %1190 = vmatpush1.bf16.msra.mxu0 %v898
    %1191 = vmatprep.subr.bf16.mxu0 0
    %1192 = vmatpush1.bf16.msra.mxu0 %v897
    %1193 = vmatprep.subr.bf16.mxu0 0
    %1194 = vmatpush2.bf16.msra.mxu0 %v912
    %1195 = vmatprep.subr.bf16.mxu0 0
    %1196 = vmatpush2.bf16.msra.mxu0 %v911
    %1197 = vmatprep.subr.bf16.mxu0 0
    %1198 = vmatpush2.bf16.msra.mxu0 %v910
    %1199 = vmatprep.subr.bf16.mxu0 0
    %1200 = vmatpush2.bf16.msra.mxu0 %v909
    %1201 = vmatprep.subr.bf16.mxu0 0
    %1202 = vmatpush2.bf16.msra.mxu0 %v908
    %1203 = vmatprep.subr.bf16.mxu0 0
    %1204 = vmatpush2.bf16.msra.mxu0 %v907
    %1205 = vmatprep.subr.bf16.mxu0 0
    %1206 = vmatpush2.bf16.msra.mxu0 %v906
    %1207 = vmatprep.subr.bf16.mxu0 0
    %1208 = vmatpush2.bf16.msra.mxu0 %v905
    %1209 = vmatprep.mubr.bf16.mxu0 %v340
    %1210 = vmatmul.mubr.bf16.gmra.mxu0 %v339
    %v1211 = vpop.f32.mrf.mxu0
    %v1212 = vadd.f32 %v1172, %v1211
    %v1213 = vpop.f32.mrf.mxu0
    %v1214 = vpop.f32.mrf.mxu0
    %v1215 = vpop.f32.mrf.mxu0
    %1216 = vdwg.mxu0
    %1217 = vmatprep.subr.bf16.mxu0 0
    %1218 = vmatpush1.bf16.msra.mxu0 %v920
    %1219 = vmatprep.subr.bf16.mxu0 0
    %1220 = vmatpush1.bf16.msra.mxu0 %v919
    %1221 = vmatprep.subr.bf16.mxu0 0
    %1222 = vmatpush1.bf16.msra.mxu0 %v918
    %1223 = vmatprep.subr.bf16.mxu0 0
    %1224 = vmatpush1.bf16.msra.mxu0 %v917
    %1225 = vmatprep.subr.bf16.mxu0 0
    %1226 = vmatpush1.bf16.msra.mxu0 %v916
    %1227 = vmatprep.subr.bf16.mxu0 0
    %1228 = vmatpush1.bf16.msra.mxu0 %v915
    %1229 = vmatprep.subr.bf16.mxu0 0
    %1230 = vmatpush1.bf16.msra.mxu0 %v914
    %1231 = vmatprep.subr.bf16.mxu0 0
    %1232 = vmatpush1.bf16.msra.mxu0 %v913
    %1233 = vmatprep.subr.bf16.mxu0 0
    %1234 = vmatpush2.bf16.msra.mxu0 %v928
    %1235 = vmatprep.subr.bf16.mxu0 0
    %1236 = vmatpush2.bf16.msra.mxu0 %v927
    %1237 = vmatprep.subr.bf16.mxu0 0
    %1238 = vmatpush2.bf16.msra.mxu0 %v926
    %1239 = vmatprep.subr.bf16.mxu0 0
    %1240 = vmatpush2.bf16.msra.mxu0 %v925
    %1241 = vmatprep.subr.bf16.mxu0 0
    %1242 = vmatpush2.bf16.msra.mxu0 %v924
    %1243 = vmatprep.subr.bf16.mxu0 0
    %1244 = vmatpush2.bf16.msra.mxu0 %v923
    %1245 = vmatprep.subr.bf16.mxu0 0
    %1246 = vmatpush2.bf16.msra.mxu0 %v922
    %1247 = vmatprep.subr.bf16.mxu0 0
    %1248 = vmatpush2.bf16.msra.mxu0 %v921
    %1249 = vmatprep.mubr.bf16.mxu0 %v342
    %1250 = vmatmul.mubr.bf16.gmra.mxu0 %v341
    %v1251 = vpop.f32.mrf.mxu0
    %v1252 = vadd.f32 %v1212, %v1251
    %v1253 = vpop.f32.mrf.mxu0
    %v1254 = vpop.f32.mrf.mxu0
    %v1255 = vpop.f32.mrf.mxu0
    %1256 = vdwg.mxu0
    %1257 = vmatprep.subr.bf16.mxu0 0
    %1258 = vmatpush1.bf16.msra.mxu0 %v936
    %1259 = vmatprep.subr.bf16.mxu0 0
    %1260 = vmatpush1.bf16.msra.mxu0 %v935
    %1261 = vmatprep.subr.bf16.mxu0 0
    %1262 = vmatpush1.bf16.msra.mxu0 %v934
    %1263 = vmatprep.subr.bf16.mxu0 0
    %1264 = vmatpush1.bf16.msra.mxu0 %v933
    %1265 = vmatprep.subr.bf16.mxu0 0
    %1266 = vmatpush1.bf16.msra.mxu0 %v932
    %1267 = vmatprep.subr.bf16.mxu0 0
    %1268 = vmatpush1.bf16.msra.mxu0 %v931
    %1269 = vmatprep.subr.bf16.mxu0 0
    %1270 = vmatpush1.bf16.msra.mxu0 %v930
    %1271 = vmatprep.subr.bf16.mxu0 0
    %1272 = vmatpush1.bf16.msra.mxu0 %v929
    %1273 = vmatprep.subr.bf16.mxu0 0
    %1274 = vmatpush2.bf16.msra.mxu0 %v944
    %1275 = vmatprep.subr.bf16.mxu0 0
    %1276 = vmatpush2.bf16.msra.mxu0 %v943
    %1277 = vmatprep.subr.bf16.mxu0 0
    %1278 = vmatpush2.bf16.msra.mxu0 %v942
    %1279 = vmatprep.subr.bf16.mxu0 0
    %1280 = vmatpush2.bf16.msra.mxu0 %v941
    %1281 = vmatprep.subr.bf16.mxu0 0
    %1282 = vmatpush2.bf16.msra.mxu0 %v940
    %1283 = vmatprep.subr.bf16.mxu0 0
    %1284 = vmatpush2.bf16.msra.mxu0 %v939
    %1285 = vmatprep.subr.bf16.mxu0 0
    %1286 = vmatpush2.bf16.msra.mxu0 %v938
    %1287 = vmatprep.subr.bf16.mxu0 0
    %1288 = vmatpush2.bf16.msra.mxu0 %v937
    %1289 = vmatprep.mubr.bf16.mxu0 %v344
    %1290 = vmatmul.mubr.bf16.gmra.mxu0 %v343
    %v1291 = vpop.f32.mrf.mxu0
    %v1292 = vadd.f32 %v1252, %v1291
    %v1293 = vpop.f32.mrf.mxu0
    %v1294 = vpop.f32.mrf.mxu0
    %v1295 = vpop.f32.mrf.mxu0
    %1296 = vdwg.mxu0
    %1297 = vmatprep.subr.bf16.mxu0 0
    %1298 = vmatpush1.bf16.msra.mxu0 %v952
    %1299 = vmatprep.subr.bf16.mxu0 0
    %1300 = vmatpush1.bf16.msra.mxu0 %v951
    %1301 = vmatprep.subr.bf16.mxu0 0
    %1302 = vmatpush1.bf16.msra.mxu0 %v950
    %1303 = vmatprep.subr.bf16.mxu0 0
    %1304 = vmatpush1.bf16.msra.mxu0 %v949
    %1305 = vmatprep.subr.bf16.mxu0 0
    %1306 = vmatpush1.bf16.msra.mxu0 %v948
    %1307 = vmatprep.subr.bf16.mxu0 0
    %1308 = vmatpush1.bf16.msra.mxu0 %v947
    %1309 = vmatprep.subr.bf16.mxu0 0
    %1310 = vmatpush1.bf16.msra.mxu0 %v946
    %1311 = vmatprep.subr.bf16.mxu0 0
    %1312 = vmatpush1.bf16.msra.mxu0 %v945
    %1313 = vmatprep.subr.bf16.mxu0 0
    %1314 = vmatpush2.bf16.msra.mxu0 %v960
    %1315 = vmatprep.subr.bf16.mxu0 0
    %1316 = vmatpush2.bf16.msra.mxu0 %v959
    %1317 = vmatprep.subr.bf16.mxu0 0
    %1318 = vmatpush2.bf16.msra.mxu0 %v958
    %1319 = vmatprep.subr.bf16.mxu0 0
    %1320 = vmatpush2.bf16.msra.mxu0 %v957
    %1321 = vmatprep.subr.bf16.mxu0 0
    %1322 = vmatpush2.bf16.msra.mxu0 %v956
    %1323 = vmatprep.subr.bf16.mxu0 0
    %1324 = vmatpush2.bf16.msra.mxu0 %v955
    %1325 = vmatprep.subr.bf16.mxu0 0
    %1326 = vmatpush2.bf16.msra.mxu0 %v954
    %1327 = vmatprep.subr.bf16.mxu0 0
    %1328 = vmatpush2.bf16.msra.mxu0 %v953
    %1329 = vmatprep.mubr.bf16.mxu0 %v346
    %1330 = vmatmul.mubr.bf16.gmra.mxu0 %v345
    %v1331 = vpop.f32.mrf.mxu0
    %v1332 = vadd.f32 %v1292, %v1331
    %v1333 = vpop.f32.mrf.mxu0
    %v1334 = vpop.f32.mrf.mxu0
    %v1335 = vpop.f32.mrf.mxu0
    %1336 = vdwg.mxu0
    %1337 = vmatprep.subr.bf16.mxu0 0
    %1338 = vmatpush1.bf16.msra.mxu0 %v968
    %1339 = vmatprep.subr.bf16.mxu0 0
    %1340 = vmatpush1.bf16.msra.mxu0 %v967
    %1341 = vmatprep.subr.bf16.mxu0 0
    %1342 = vmatpush1.bf16.msra.mxu0 %v966
    %1343 = vmatprep.subr.bf16.mxu0 0
    %1344 = vmatpush1.bf16.msra.mxu0 %v965
    %1345 = vmatprep.subr.bf16.mxu0 0
    %1346 = vmatpush1.bf16.msra.mxu0 %v964
    %1347 = vmatprep.subr.bf16.mxu0 0
    %1348 = vmatpush1.bf16.msra.mxu0 %v963
    %1349 = vmatprep.subr.bf16.mxu0 0
    %1350 = vmatpush1.bf16.msra.mxu0 %v962
    %1351 = vmatprep.subr.bf16.mxu0 0
    %1352 = vmatpush1.bf16.msra.mxu0 %v961
    %1353 = vmatprep.subr.bf16.mxu0 0
    %1354 = vmatpush2.bf16.msra.mxu0 %v976
    %1355 = vmatprep.subr.bf16.mxu0 0
    %1356 = vmatpush2.bf16.msra.mxu0 %v975
    %1357 = vmatprep.subr.bf16.mxu0 0
    %1358 = vmatpush2.bf16.msra.mxu0 %v974
    %1359 = vmatprep.subr.bf16.mxu0 0
    %1360 = vmatpush2.bf16.msra.mxu0 %v973
    %1361 = vmatprep.subr.bf16.mxu0 0
    %1362 = vmatpush2.bf16.msra.mxu0 %v972
    %1363 = vmatprep.subr.bf16.mxu0 0
    %1364 = vmatpush2.bf16.msra.mxu0 %v971
    %1365 = vmatprep.subr.bf16.mxu0 0
    %1366 = vmatpush2.bf16.msra.mxu0 %v970
    %1367 = vmatprep.subr.bf16.mxu0 0
    %1368 = vmatpush2.bf16.msra.mxu0 %v969
    %1369 = vmatprep.mubr.bf16.mxu0 %v348
    %1370 = vmatmul.mubr.bf16.gmra.mxu0 %v347
    %v1371 = vpop.f32.mrf.mxu0
    %v1372 = vadd.f32 %v1332, %v1371
    %v1373 = vpop.f32.mrf.mxu0
    %v1374 = vpop.f32.mrf.mxu0
    %v1375 = vpop.f32.mrf.mxu0
    %1376 = vdwg.mxu0
    %1377 = vmatprep.subr.bf16.mxu0 0
    %1378 = vmatpush1.bf16.msra.mxu0 %v984
    %1379 = vmatprep.subr.bf16.mxu0 0
    %1380 = vmatpush1.bf16.msra.mxu0 %v983
    %1381 = vmatprep.subr.bf16.mxu0 0
    %1382 = vmatpush1.bf16.msra.mxu0 %v982
    %1383 = vmatprep.subr.bf16.mxu0 0
    %1384 = vmatpush1.bf16.msra.mxu0 %v981
    %1385 = vmatprep.subr.bf16.mxu0 0
    %1386 = vmatpush1.bf16.msra.mxu0 %v980
    %1387 = vmatprep.subr.bf16.mxu0 0
    %1388 = vmatpush1.bf16.msra.mxu0 %v979
    %1389 = vmatprep.subr.bf16.mxu0 0
    %1390 = vmatpush1.bf16.msra.mxu0 %v978
    %1391 = vmatprep.subr.bf16.mxu0 0
    %1392 = vmatpush1.bf16.msra.mxu0 %v977
    %1393 = vmatprep.subr.bf16.mxu0 0
    %1394 = vmatpush2.bf16.msra.mxu0 %v992
    %1395 = vmatprep.subr.bf16.mxu0 0
    %1396 = vmatpush2.bf16.msra.mxu0 %v991
    %1397 = vmatprep.subr.bf16.mxu0 0
    %1398 = vmatpush2.bf16.msra.mxu0 %v990
    %1399 = vmatprep.subr.bf16.mxu0 0
    %1400 = vmatpush2.bf16.msra.mxu0 %v989
    %1401 = vmatprep.subr.bf16.mxu0 0
    %1402 = vmatpush2.bf16.msra.mxu0 %v988
    %1403 = vmatprep.subr.bf16.mxu0 0
    %1404 = vmatpush2.bf16.msra.mxu0 %v987
    %1405 = vmatprep.subr.bf16.mxu0 0
    %1406 = vmatpush2.bf16.msra.mxu0 %v986
    %1407 = vmatprep.subr.bf16.mxu0 0
    %1408 = vmatpush2.bf16.msra.mxu0 %v985
    %1409 = vmatprep.mubr.bf16.mxu0 %v350
    %1410 = vmatmul.mubr.bf16.gmra.mxu0 %v349
    %v1411 = vpop.f32.mrf.mxu0
    %v1412 = vadd.f32 %v1372, %v1411
    %v1413 = vpop.f32.mrf.mxu0
    %v1414 = vpop.f32.mrf.mxu0
    %v1415 = vpop.f32.mrf.mxu0
    %1416 = vdwg.mxu0
    %1417 = vmatprep.subr.bf16.mxu0 0
    %1418 = vmatpush1.bf16.msra.mxu0 %v1000
    %1419 = vmatprep.subr.bf16.mxu0 0
    %1420 = vmatpush1.bf16.msra.mxu0 %v999
    %1421 = vmatprep.subr.bf16.mxu0 0
    %1422 = vmatpush1.bf16.msra.mxu0 %v998
    %1423 = vmatprep.subr.bf16.mxu0 0
    %1424 = vmatpush1.bf16.msra.mxu0 %v997
    %1425 = vmatprep.subr.bf16.mxu0 0
    %1426 = vmatpush1.bf16.msra.mxu0 %v996
    %1427 = vmatprep.subr.bf16.mxu0 0
    %1428 = vmatpush1.bf16.msra.mxu0 %v995
    %1429 = vmatprep.subr.bf16.mxu0 0
    %1430 = vmatpush1.bf16.msra.mxu0 %v994
    %1431 = vmatprep.subr.bf16.mxu0 0
    %1432 = vmatpush1.bf16.msra.mxu0 %v993
    %1433 = vmatprep.subr.bf16.mxu0 0
    %1434 = vmatpush2.bf16.msra.mxu0 %v1008
    %1435 = vmatprep.subr.bf16.mxu0 0
    %1436 = vmatpush2.bf16.msra.mxu0 %v1007
    %1437 = vmatprep.subr.bf16.mxu0 0
    %1438 = vmatpush2.bf16.msra.mxu0 %v1006
    %1439 = vmatprep.subr.bf16.mxu0 0
    %1440 = vmatpush2.bf16.msra.mxu0 %v1005
    %1441 = vmatprep.subr.bf16.mxu0 0
    %1442 = vmatpush2.bf16.msra.mxu0 %v1004
    %1443 = vmatprep.subr.bf16.mxu0 0
    %1444 = vmatpush2.bf16.msra.mxu0 %v1003
    %1445 = vmatprep.subr.bf16.mxu0 0
    %1446 = vmatpush2.bf16.msra.mxu0 %v1002
    %1447 = vmatprep.subr.bf16.mxu0 0
    %1448 = vmatpush2.bf16.msra.mxu0 %v1001
    %1449 = vmatprep.mubr.bf16.mxu0 %v352
    %1450 = vmatmul.mubr.bf16.gmra.mxu0 %v351
    %v1451 = vpop.f32.mrf.mxu0
    %v1452 = vadd.f32 %v1412, %v1451
    %v1453 = vpop.f32.mrf.mxu0
    %v1454 = vpop.f32.mrf.mxu0
    %v1455 = vpop.f32.mrf.mxu0
    %1456 = vdwg.mxu0
    %1457 = vst [vmem:[#allocation7] sm:$0xff] %v1452
    // Predicated region
    $region22: #{tpu_custom_call.1} parent=1 // pred_check
      _
    $region23: #{tpu_custom_call.1} parent=1 // pred_check_branch
      %1459 = sbr.rel (0) target = $region25
    $region24: #{tpu_custom_call.1} parent=1 // pred_region
      %s1461 = ssub.s32 128, 128
      %1462 = vsyncadd [#allocation4], %s1461
      %s1464 = sshll.u32 [#allocation7], 4
      %s1465 = int_to_ptr.vmem [resolvable:$true] %s1464
      %1467 = dma.vmem_to_hbm [thread:$0]  %s1465, 128, %s3, [#allocation4]
    $region25: #{tpu_custom_call.1} parent=1 // pred_fallthru
      _
    // Predicated region
    $region26: #{tpu_custom_call.1} parent=1 // pred_check
      _
    $region27: #{tpu_custom_call.1} parent=1 // pred_check_branch
      %1469 = sbr.rel (0) target = $region29
    $region28: #{tpu_custom_call.1} parent=1 // pred_region
      %1470 = dma.done [#allocation4], 128
    $region29: #{tpu_custom_call.1} parent=1 // pred_fallthru
      _
    %1471 = vsyncpa [#allocation3], 1
    %1472 = vsyncpa [#allocation6], 1
    %1473 = vsyncpa [#allocation4], 1

</llo_original>
